<compile_context>
chip_gen: v6e
topology: v6e:2x2x1
jax: 0.10.0
libtpu: 0.0.40
codegen_flags: <defaults>
</compile_context>

<pallas_src>
import functools

import jax
import jax.numpy as jnp
from jax import lax
from jax.experimental import pallas as pl
from jax.experimental.pallas import tpu as pltpu

EPS = 1e-5


def _res2d_mp_kernel(H, W, C, p, NB, G,
                     x_ref, w1_ref, s1_ref, t1_ref, w2_ref, s2_ref, t2_ref,
                     out_ref, ybuf_ref):
    """Fused conv3x3+bn+relu -> conv3x3+bn -> +x -> relu -> height-pool for one batch block."""
    f32 = jnp.float32
    WC = W * C
    RS = H + 2                   # rows per padded sample
    LEN = NB * RS                # rows in the compute band
    Ho = H // p

    def foreach_sample(fn):
        if NB <= 8:
            for n in range(NB):  # small static unroll
                fn(n)
        else:
            pl.loop(0, NB)(fn)   # rolled loop bounds live ranges for large NB

    # Zero the guard rows: conv2's dy-shifted reads and the pool window-max read up to
    # (p-1) rows past the band, so the guards must stay zero every step.
    ybuf_ref[pl.ds(0, G), :] = jnp.zeros((G, WC), f32)
    ybuf_ref[pl.ds(G + LEN, G), :] = jnp.zeros((G, WC), f32)

    def conv3x3(src, w_ref):
        # out[h] = sum_dy x[h + dy - 1] @ M_dy   (M_dy folds dx taps + channel contraction)
        acc = jnp.dot(src(-1), w_ref[0], preferred_element_type=f32)
        acc = acc + jnp.dot(src(0), w_ref[1], preferred_element_type=f32)
        acc = acc + jnp.dot(src(1), w_ref[2], preferred_element_type=f32)
        return acc

    # ---------------- conv1 + bn1 + relu ----------------
    a1 = conv3x3(lambda off: x_ref[0, pl.ds(G + off, LEN), :], w1_ref)
    y1 = jnp.maximum(a1 * s1_ref[...] + t1_ref[...], 0.0)
    ybuf_ref[pl.ds(G, LEN), :] = y1

    # Force each sample's two padding rows back to zero so conv2 sees clean zero padding.
    zrow = jnp.zeros((1, WC), f32)

    def zero_pad_rows(n):
        base = G + n * RS
        ybuf_ref[pl.ds(base, 1), :] = zrow            # top pad row
        ybuf_ref[pl.ds(base + H + 1, 1), :] = zrow    # bottom pad row

    foreach_sample(zero_pad_rows)

    # ---------------- conv2 + bn2 + residual add + relu ----------------
    a2 = conv3x3(lambda off: ybuf_ref[pl.ds(G + off, LEN), :], w2_ref)
    r = jnp.maximum(a2 * s2_ref[...] + t2_ref[...] + x_ref[0, pl.ds(G, LEN), :], 0.0)
    ybuf_ref[pl.ds(G, LEN), :] = r

    # ---------------- height-window max (p-1 shifted full-band maxima) ----------------
    # Reads up to (p-1) rows into the zeroed bottom guard; r >= 0 post-ReLU and those rows
    # are never selected below, so this is safe.
    m = r
    for q in range(1, p):
        m = jnp.maximum(m, ybuf_ref[pl.ds(G + q, LEN), :])
    ybuf_ref[pl.ds(G, LEN), :] = m

    # ---------------- one stride-p row selection per sample -> lane-dense output slab ----------------
    def select_sample(n):
        start = G + n * RS + 1
        sel = ybuf_ref[pl.ds(start, Ho, stride=p), :]
        out_ref[0, pl.ds(n * Ho, Ho), :] = sel.astype(out_ref.dtype)

    foreach_sample(select_sample)


def res_2d_mp(x_nchw, params, pooling=2, max_block_bytes=2 << 20):
    """Pallas forward for Res_2d_mp.  x_nchw: (N, C, H, W) float32 -> (N, C, H//p, W//p)."""
    N, C, H, W = x_nchw.shape
    p = pooling
    assert H % p == 0 and W % p == 0, "pooling must divide spatial dims"
    f32 = jnp.float32
    WC = W * C                    # lane width of the band (128 for the test config)
    RS = H + 2
    G = 8                         # guard rows (sublane aligned); needs G >= p - 1
    assert p - 1 <= G
    Ho, Wo = H // p, W // p

    # Samples per grid step: biggest divisor of N under the byte cap, but keep >= 2 grid
    # steps when N allows so both v7x TensorCores get work.
    per_sample_bytes = RS * WC * 4
    NB = 1
    for d in range(2, N + 1):
        if N % d:
            continue
        if d * per_sample_bytes > max_block_bytes:
            continue
        if N // d < 2:
            continue
        NB = d
    NBLK = N // NB
    LEN = NB * RS
    TOT = LEN + 2 * G

    # ---- layout plumbing (plain JAX): NCHW -> (rows, W*C) lane-dense band; pad H only ----
    x_rows = jnp.transpose(x_nchw, (0, 2, 3, 1)).reshape(N, H, WC).astype(f32)
    xp = jnp.pad(x_rows, ((0, 0), (1, 1), (0, 0)))            # zero row above/below each sample
    xb = jnp.pad(xp.reshape(NBLK, LEN, WC), ((0, 0), (G, G), (0, 0)))   # guard rows

    # ---- fold conv bias + BN (inference) into per-lane scale/shift ----
    def fold_bn(bias, gamma, beta, mean, var):
        s = gamma * lax.rsqrt(var + EPS)
        t = beta + (bias - mean) * s
        return (jnp.tile(s, W).reshape(1, WC).astype(f32),
                jnp.tile(t, W).reshape(1, WC).astype(f32))

    s1, t1 = fold_bn(params["b1"], params["g1"], params["beta1"], params["m1"], params["v1"])
    s2, t2 = fold_bn(params["b2"], params["g2"], params["beta2"], params["m2"], params["v2"])

    # ---- banded weight matrices: M_dy[w_in*C+ci, w_out*C+co] = w[dy, w_in-w_out+1, ci, co] ----
    def banded_weights(w_hwio):
        wi = jnp.arange(W)[:, None]
        wo = jnp.arange(W)[None, :]
        dx = wi - wo + 1                                       # (W, W)
        valid = ((dx >= 0) & (dx <= 2)).astype(f32)[:, :, None, None]
        dx_c = jnp.clip(dx, 0, 2)
        mats = []
        for dy in range(3):
            blk = w_hwio[dy][dx_c] * valid                     # (W, W, C, C)
            mats.append(jnp.transpose(blk, (0, 2, 1, 3)).reshape(WC, WC))
        return jnp.stack(mats, 0).astype(f32)                  # (3, WC, WC)

    m1 = banded_weights(params["w1"].astype(f32))
    m2 = banded_weights(params["w2"].astype(f32))

    kernel = functools.partial(_res2d_mp_kernel, H, W, C, p, NB, G)

    slab = pl.pallas_call(
        kernel,
        out_shape=jax.ShapeDtypeStruct((NBLK, NB * Ho, WC), f32),
        grid=(NBLK,),
        in_specs=[
            pl.BlockSpec((1, TOT, WC), lambda n: (n, 0, 0)),       # padded input band
            pl.BlockSpec((3, WC, WC), lambda n: (0, 0, 0)),        # conv1 banded weights
            pl.BlockSpec((1, WC), lambda n: (0, 0)),               # bn1 scale (per lane)
            pl.BlockSpec((1, WC), lambda n: (0, 0)),               # bn1 shift
            pl.BlockSpec((3, WC, WC), lambda n: (0, 0, 0)),        # conv2 banded weights
            pl.BlockSpec((1, WC), lambda n: (0, 0)),               # bn2 scale
            pl.BlockSpec((1, WC), lambda n: (0, 0)),               # bn2 shift
        ],
        out_specs=pl.BlockSpec((1, NB * Ho, WC), lambda n: (n, 0, 0)),
        scratch_shapes=[pltpu.VMEM((TOT, WC), f32)],               # conv2 input / pool band
        compiler_params=pltpu.CompilerParams(
            dimension_semantics=("parallel",),
            vmem_limit_bytes=48 << 20,                             # safe on v5e/v6e/v7x (64 MiB)
        ),
    )(xb, m1, s1, t1, m2, s2, t2)

    # Width-window max + lane compaction on the tiny lane-dense slab (layout plumbing only).
    hmax = slab.reshape(N, Ho, W, C)
    pooled = hmax.reshape(N, Ho, Wo, p, C).max(axis=3)
    return jnp.transpose(pooled, (0, 3, 1, 2))                     # back to NCHW


# ---------------------------- parameters & reference ----------------------------

def make_params(key, C):
    ks = jax.random.split(key, 12)
    f32 = jnp.float32

    def layer(kw, kb, kg, kbe, km, kv):
        return dict(
            w=0.2 * jax.random.normal(kw, (3, 3, C, C), f32),          # HWIO
            b=0.1 * jax.random.normal(kb, (C,), f32),
            g=1.0 + 0.1 * jax.random.normal(kg, (C,), f32),
            beta=0.1 * jax.random.normal(kbe, (C,), f32),
            m=0.1 * jax.random.normal(km, (C,), f32),
            v=jax.random.uniform(kv, (C,), f32, minval=0.5, maxval=1.5),
        )

    l1 = layer(*ks[0:6])
    l2 = layer(*ks[6:12])
    return dict(
        w1=l1["w"], b1=l1["b"], g1=l1["g"], beta1=l1["beta"], m1=l1["m"], v1=l1["v"],
        w2=l2["w"], b2=l2["b"], g2=l2["g"], beta2=l2["beta"], m2=l2["m"], v2=l2["v"],
    )


def ref_forward(x_nchw, prm, pooling=2):
    """Pure-JAX reference (inference-mode BN)."""
    x = jnp.transpose(x_nchw, (0, 2, 3, 1)).astype(jnp.float32)

    def conv(h, w, b):
        y = lax.conv_general_dilated(h, w, (1, 1), "SAME",
                                     dimension_numbers=("NHWC", "HWIO", "NHWC"))
        return y + b

    def bn(z, g, beta, m, v):
        return (z - m) * (g * lax.rsqrt(v + EPS)) + beta

    h = jax.nn.relu(bn(conv(x, prm["w1"], prm["b1"]), prm["g1"], prm["beta1"], prm["m1"], prm["v1"]))
    h = bn(conv(h, prm["w2"], prm["b2"]), prm["g2"], prm["beta2"], prm["m2"], prm["v2"])
    r = jax.nn.relu(x + h)
    N, H, W, C = r.shape
    pz = pooling
    r = r.reshape(N, H // pz, pz, W // pz, pz, C).max(axis=(2, 4))
    return jnp.transpose(r, (0, 3, 1, 2))


if __name__ == "__main__":
    N, C, H, W = 2, 8, 16, 16       # residual requires input_channels == output_channels
    key = jax.random.PRNGKey(0)
    kx, kp = jax.random.split(key)
    x = jax.random.normal(kx, (N, C, H, W), jnp.float32)
    params = make_params(kp, C)

    out = res_2d_mp(x, params, pooling=2)
    out = jax.block_until_ready(out)

    ref = ref_forward(x, params, pooling=2)
    assert out.shape == (N, C, H // 2, W // 2), out.shape

    err = float(jnp.max(jnp.abs(out - ref)))
    rel = float(jnp.linalg.norm(out - ref) / (jnp.linalg.norm(ref) + 1e-12))
    # Kernel runs the convs on the MXU at default (bf16-input) precision; tolerance covers
    # the case where XLA evaluates the tiny reference conv at full f32 instead.
    assert err < 5e-2 and rel < 2e-2, f"mismatch vs reference: max abs {err}, rel l2 {rel}"

    print("KERNEL_OK")
</pallas_src>

<mosaic_0001>
module attributes {stable_mosaic.version = 11 : i64} {
  func.func @_res2d_mp_kernel(%arg0: i32, %arg1: memref<1x34x128xf32, #tpu.memory_space<vmem>>, %arg2: memref<3x128x128xf32, #tpu.memory_space<vmem>>, %arg3: memref<1x128xf32, #tpu.memory_space<vmem>>, %arg4: memref<1x128xf32, #tpu.memory_space<vmem>>, %arg5: memref<3x128x128xf32, #tpu.memory_space<vmem>>, %arg6: memref<1x128xf32, #tpu.memory_space<vmem>>, %arg7: memref<1x128xf32, #tpu.memory_space<vmem>>, %arg8: memref<1x8x128xf32, #tpu.memory_space<vmem>>, %arg9: memref<34x128xf32, #tpu.memory_space<vmem>>) attributes {dimension_semantics = [#tpu.dimension_semantics<parallel>], iteration_bounds = array<i64: 2>, scalar_prefetch = 0 : i64, scratch_operands = 1 : i64, tpu.core_type = #tpu.core_type<tc>, window_params = [{transform_indices = @transform_0, window_bounds = array<i64: 1, 34, 128>}, {pipeline_mode = #tpu.pipeline_mode<synchronous>, transform_indices = @transform_1, window_bounds = array<i64: 3, 128, 128>}, {pipeline_mode = #tpu.pipeline_mode<synchronous>, transform_indices = @transform_2, window_bounds = array<i64: 1, 128>}, {pipeline_mode = #tpu.pipeline_mode<synchronous>, transform_indices = @transform_3, window_bounds = array<i64: 1, 128>}, {pipeline_mode = #tpu.pipeline_mode<synchronous>, transform_indices = @transform_4, window_bounds = array<i64: 3, 128, 128>}, {pipeline_mode = #tpu.pipeline_mode<synchronous>, transform_indices = @transform_5, window_bounds = array<i64: 1, 128>}, {pipeline_mode = #tpu.pipeline_mode<synchronous>, transform_indices = @transform_6, window_bounds = array<i64: 1, 128>}, {transform_indices = @transform_7, window_bounds = array<i64: 1, 8, 128>}]} {
    %cst = arith.constant 0.000000e+00 : f32
    %0 = vector.broadcast %cst : f32 to vector<8x128xf32>
    %c0 = arith.constant 0 : index
    %c0_0 = arith.constant 0 : index
    %1 = vector.load %arg9[%c0, %c0_0] : memref<34x128xf32, #tpu.memory_space<vmem>>, vector<8x128xf32>
    tpu.vector_store %arg9[%c0, %c0_0], %0 {strides = array<i32>} : memref<34x128xf32, #tpu.memory_space<vmem>>, vector<8x128xf32>,
    %cst_1 = arith.constant 0.000000e+00 : f32
    %2 = vector.broadcast %cst_1 : f32 to vector<8x128xf32>
    %c26 = arith.constant 26 : index
    %c0_2 = arith.constant 0 : index
    %3 = vector.load %arg9[%c26, %c0_2] : memref<34x128xf32, #tpu.memory_space<vmem>>, vector<8x128xf32>
    tpu.vector_store %arg9[%c26, %c0_2], %2 {strides = array<i32>} : memref<34x128xf32, #tpu.memory_space<vmem>>, vector<8x128xf32>,
    %c0_3 = arith.constant 0 : index
    %c7 = arith.constant 7 : index
    %c0_4 = arith.constant 0 : index
    %4 = vector.load %arg1[%c0_3, %c7, %c0_4] : memref<1x34x128xf32, #tpu.memory_space<vmem>>, vector<1x18x128xf32>
    %5 = vector.shape_cast %4 : vector<1x18x128xf32> to vector<18x128xf32>
    %c0_5 = arith.constant 0 : index
    %c0_6 = arith.constant 0 : index
    %c0_7 = arith.constant 0 : index
    %6 = vector.load %arg2[%c0_5, %c0_6, %c0_7] : memref<3x128x128xf32, #tpu.memory_space<vmem>>, vector<1x128x128xf32>
    %7 = vector.shape_cast %6 : vector<1x128x128xf32> to vector<128x128xf32>
    %cst_8 = arith.constant dense<0.000000e+00> : vector<18x128xf32>
    %8 = tpu.matmul %5, %7, %cst_8 {dimension_numbers = #tpu.dot_dimension_numbers<[1], [0], [0], [1], [0, 0, 1, 1], [], []>} : vector<18x128xf32>, vector<128x128xf32>, vector<18x128xf32> -> vector<18x128xf32>
    %c0_9 = arith.constant 0 : index
    %c8 = arith.constant 8 : index
    %c0_10 = arith.constant 0 : index
    %9 = vector.load %arg1[%c0_9, %c8, %c0_10] : memref<1x34x128xf32, #tpu.memory_space<vmem>>, vector<1x18x128xf32>
    %10 = vector.shape_cast %9 : vector<1x18x128xf32> to vector<18x128xf32>
    %c1 = arith.constant 1 : index
    %c0_11 = arith.constant 0 : index
    %c0_12 = arith.constant 0 : index
    %11 = vector.load %arg2[%c1, %c0_11, %c0_12] : memref<3x128x128xf32, #tpu.memory_space<vmem>>, vector<1x128x128xf32>
    %12 = vector.shape_cast %11 : vector<1x128x128xf32> to vector<128x128xf32>
    %cst_13 = arith.constant dense<0.000000e+00> : vector<18x128xf32>
    %13 = tpu.matmul %10, %12, %cst_13 {dimension_numbers = #tpu.dot_dimension_numbers<[1], [0], [0], [1], [0, 0, 1, 1], [], []>} : vector<18x128xf32>, vector<128x128xf32>, vector<18x128xf32> -> vector<18x128xf32>
    %14 = arith.addf %8, %13 : vector<18x128xf32>
    %c0_14 = arith.constant 0 : index
    %c9 = arith.constant 9 : index
    %c0_15 = arith.constant 0 : index
    %15 = vector.load %arg1[%c0_14, %c9, %c0_15] : memref<1x34x128xf32, #tpu.memory_space<vmem>>, vector<1x18x128xf32>
    %16 = vector.shape_cast %15 : vector<1x18x128xf32> to vector<18x128xf32>
    %c2 = arith.constant 2 : index
    %c0_16 = arith.constant 0 : index
    %c0_17 = arith.constant 0 : index
    %17 = vector.load %arg2[%c2, %c0_16, %c0_17] : memref<3x128x128xf32, #tpu.memory_space<vmem>>, vector<1x128x128xf32>
    %18 = vector.shape_cast %17 : vector<1x128x128xf32> to vector<128x128xf32>
    %cst_18 = arith.constant dense<0.000000e+00> : vector<18x128xf32>
    %19 = tpu.matmul %16, %18, %cst_18 {dimension_numbers = #tpu.dot_dimension_numbers<[1], [0], [0], [1], [0, 0, 1, 1], [], []>} : vector<18x128xf32>, vector<128x128xf32>, vector<18x128xf32> -> vector<18x128xf32>
    %20 = arith.addf %14, %19 : vector<18x128xf32>
    %c0_19 = arith.constant 0 : index
    %c0_20 = arith.constant 0 : index
    %21 = vector.load %arg3[%c0_19, %c0_20] : memref<1x128xf32, #tpu.memory_space<vmem>>, vector<1x128xf32>
    %22 = vector.broadcast %21 : vector<1x128xf32> to vector<18x128xf32>
    %23 = arith.mulf %20, %22 : vector<18x128xf32>
    %c0_21 = arith.constant 0 : index
    %c0_22 = arith.constant 0 : index
    %24 = vector.load %arg4[%c0_21, %c0_22] : memref<1x128xf32, #tpu.memory_space<vmem>>, vector<1x128xf32>
    %25 = vector.broadcast %24 : vector<1x128xf32> to vector<18x128xf32>
    %26 = arith.addf %23, %25 : vector<18x128xf32>
    %cst_23 = arith.constant 0.000000e+00 : f32
    %27 = vector.broadcast %cst_23 : f32 to vector<18x128xf32>
    %28 = arith.maximumf %26, %27 : vector<18x128xf32>
    %c8_24 = arith.constant 8 : index
    %c0_25 = arith.constant 0 : index
    %29 = vector.load %arg9[%c8_24, %c0_25] : memref<34x128xf32, #tpu.memory_space<vmem>>, vector<18x128xf32>
    tpu.vector_store %arg9[%c8_24, %c0_25], %28 {strides = array<i32>} : memref<34x128xf32, #tpu.memory_space<vmem>>, vector<18x128xf32>,
    %cst_26 = arith.constant 0.000000e+00 : f32
    %30 = vector.broadcast %cst_26 : f32 to vector<1x128xf32>
    %c8_27 = arith.constant 8 : index
    %c0_28 = arith.constant 0 : index
    %31 = vector.load %arg9[%c8_27, %c0_28] : memref<34x128xf32, #tpu.memory_space<vmem>>, vector<1x128xf32>
    tpu.vector_store %arg9[%c8_27, %c0_28], %30 {strides = array<i32>} : memref<34x128xf32, #tpu.memory_space<vmem>>, vector<1x128xf32>,
    %c25 = arith.constant 25 : index
    %c0_29 = arith.constant 0 : index
    %32 = vector.load %arg9[%c25, %c0_29] : memref<34x128xf32, #tpu.memory_space<vmem>>, vector<1x128xf32>
    tpu.vector_store %arg9[%c25, %c0_29], %30 {strides = array<i32>} : memref<34x128xf32, #tpu.memory_space<vmem>>, vector<1x128xf32>,
    %c7_30 = arith.constant 7 : index
    %c0_31 = arith.constant 0 : index
    %33 = vector.load %arg9[%c7_30, %c0_31] : memref<34x128xf32, #tpu.memory_space<vmem>>, vector<18x128xf32>
    %c0_32 = arith.constant 0 : index
    %c0_33 = arith.constant 0 : index
    %c0_34 = arith.constant 0 : index
    %34 = vector.load %arg5[%c0_32, %c0_33, %c0_34] : memref<3x128x128xf32, #tpu.memory_space<vmem>>, vector<1x128x128xf32>
    %35 = vector.shape_cast %34 : vector<1x128x128xf32> to vector<128x128xf32>
    %cst_35 = arith.constant dense<0.000000e+00> : vector<18x128xf32>
    %36 = tpu.matmul %33, %35, %cst_35 {dimension_numbers = #tpu.dot_dimension_numbers<[1], [0], [0], [1], [0, 0, 1, 1], [], []>} : vector<18x128xf32>, vector<128x128xf32>, vector<18x128xf32> -> vector<18x128xf32>
    %c8_36 = arith.constant 8 : index
    %c0_37 = arith.constant 0 : index
    %37 = vector.load %arg9[%c8_36, %c0_37] : memref<34x128xf32, #tpu.memory_space<vmem>>, vector<18x128xf32>
    %c1_38 = arith.constant 1 : index
    %c0_39 = arith.constant 0 : index
    %c0_40 = arith.constant 0 : index
    %38 = vector.load %arg5[%c1_38, %c0_39, %c0_40] : memref<3x128x128xf32, #tpu.memory_space<vmem>>, vector<1x128x128xf32>
    %39 = vector.shape_cast %38 : vector<1x128x128xf32> to vector<128x128xf32>
    %cst_41 = arith.constant dense<0.000000e+00> : vector<18x128xf32>
    %40 = tpu.matmul %37, %39, %cst_41 {dimension_numbers = #tpu.dot_dimension_numbers<[1], [0], [0], [1], [0, 0, 1, 1], [], []>} : vector<18x128xf32>, vector<128x128xf32>, vector<18x128xf32> -> vector<18x128xf32>
    %41 = arith.addf %36, %40 : vector<18x128xf32>
    %c9_42 = arith.constant 9 : index
    %c0_43 = arith.constant 0 : index
    %42 = vector.load %arg9[%c9_42, %c0_43] : memref<34x128xf32, #tpu.memory_space<vmem>>, vector<18x128xf32>
    %c2_44 = arith.constant 2 : index
    %c0_45 = arith.constant 0 : index
    %c0_46 = arith.constant 0 : index
    %43 = vector.load %arg5[%c2_44, %c0_45, %c0_46] : memref<3x128x128xf32, #tpu.memory_space<vmem>>, vector<1x128x128xf32>
    %44 = vector.shape_cast %43 : vector<1x128x128xf32> to vector<128x128xf32>
    %cst_47 = arith.constant dense<0.000000e+00> : vector<18x128xf32>
    %45 = tpu.matmul %42, %44, %cst_47 {dimension_numbers = #tpu.dot_dimension_numbers<[1], [0], [0], [1], [0, 0, 1, 1], [], []>} : vector<18x128xf32>, vector<128x128xf32>, vector<18x128xf32> -> vector<18x128xf32>
    %46 = arith.addf %41, %45 : vector<18x128xf32>
    %c0_48 = arith.constant 0 : index
    %c0_49 = arith.constant 0 : index
    %47 = vector.load %arg6[%c0_48, %c0_49] : memref<1x128xf32, #tpu.memory_space<vmem>>, vector<1x128xf32>
    %48 = vector.broadcast %47 : vector<1x128xf32> to vector<18x128xf32>
    %49 = arith.mulf %46, %48 : vector<18x128xf32>
    %c0_50 = arith.constant 0 : index
    %c0_51 = arith.constant 0 : index
    %50 = vector.load %arg7[%c0_50, %c0_51] : memref<1x128xf32, #tpu.memory_space<vmem>>, vector<1x128xf32>
    %51 = vector.broadcast %50 : vector<1x128xf32> to vector<18x128xf32>
    %52 = arith.addf %49, %51 : vector<18x128xf32>
    %c0_52 = arith.constant 0 : index
    %c8_53 = arith.constant 8 : index
    %c0_54 = arith.constant 0 : index
    %53 = vector.load %arg1[%c0_52, %c8_53, %c0_54] : memref<1x34x128xf32, #tpu.memory_space<vmem>>, vector<1x18x128xf32>
    %54 = vector.shape_cast %53 : vector<1x18x128xf32> to vector<18x128xf32>
    %55 = arith.addf %52, %54 : vector<18x128xf32>
    %cst_55 = arith.constant 0.000000e+00 : f32
    %56 = vector.broadcast %cst_55 : f32 to vector<18x128xf32>
    %57 = arith.maximumf %55, %56 : vector<18x128xf32>
    %c8_56 = arith.constant 8 : index
    %c0_57 = arith.constant 0 : index
    %58 = vector.load %arg9[%c8_56, %c0_57] : memref<34x128xf32, #tpu.memory_space<vmem>>, vector<18x128xf32>
    tpu.vector_store %arg9[%c8_56, %c0_57], %57 {strides = array<i32>} : memref<34x128xf32, #tpu.memory_space<vmem>>, vector<18x128xf32>,
    %c9_58 = arith.constant 9 : index
    %c0_59 = arith.constant 0 : index
    %59 = vector.load %arg9[%c9_58, %c0_59] : memref<34x128xf32, #tpu.memory_space<vmem>>, vector<18x128xf32>
    %60 = arith.maximumf %57, %59 : vector<18x128xf32>
    %c8_60 = arith.constant 8 : index
    %c0_61 = arith.constant 0 : index
    %61 = vector.load %arg9[%c8_60, %c0_61] : memref<34x128xf32, #tpu.memory_space<vmem>>, vector<18x128xf32>
    tpu.vector_store %arg9[%c8_60, %c0_61], %60 {strides = array<i32>} : memref<34x128xf32, #tpu.memory_space<vmem>>, vector<18x128xf32>,
    %c9_62 = arith.constant 9 : index
    %c0_63 = arith.constant 0 : index
    %62 = tpu.strided_load %arg9[%c9_62, %c0_63] {strides = array<i32: 2, 1>} : memref<34x128xf32, #tpu.memory_space<vmem>>, vector<8x128xf32>
    %c0_64 = arith.constant 0 : index
    %c0_65 = arith.constant 0 : index
    %c0_66 = arith.constant 0 : index
    %63 = vector.load %arg8[%c0_64, %c0_65, %c0_66] : memref<1x8x128xf32, #tpu.memory_space<vmem>>, vector<1x8x128xf32>
    %64 = vector.shape_cast %63 : vector<1x8x128xf32> to vector<8x128xf32>
    %65 = vector.shape_cast %62 : vector<8x128xf32> to vector<1x8x128xf32>
    tpu.vector_store %arg8[%c0_64, %c0_65, %c0_66], %65 {strides = array<i32>} : memref<1x8x128xf32, #tpu.memory_space<vmem>>, vector<1x8x128xf32>,
    return
  }
  func.func @transform_0(%arg0: i32) -> (i32, i32, i32) {
    %c0_i32 = arith.constant 0 : i32
    %c0_i32_0 = arith.constant 0 : i32
    %c0_i32_1 = arith.constant 0 : i32
    return %arg0, %c0_i32, %c0_i32_0 : i32, i32, i32
  }
  func.func @transform_1(%arg0: i32) -> (i32, i32, i32) {
    %c0_i32 = arith.constant 0 : i32
    %c0_i32_0 = arith.constant 0 : i32
    %c0_i32_1 = arith.constant 0 : i32
    %c0_i32_2 = arith.constant 0 : i32
    return %c0_i32, %c0_i32_0, %c0_i32_1 : i32, i32, i32
  }
  func.func @transform_2(%arg0: i32) -> (i32, i32) {
    %c0_i32 = arith.constant 0 : i32
    %c0_i32_0 = arith.constant 0 : i32
    %c0_i32_1 = arith.constant 0 : i32
    return %c0_i32, %c0_i32_0 : i32, i32
  }
  func.func @transform_3(%arg0: i32) -> (i32, i32) {
    %c0_i32 = arith.constant 0 : i32
    %c0_i32_0 = arith.constant 0 : i32
    %c0_i32_1 = arith.constant 0 : i32
    return %c0_i32, %c0_i32_0 : i32, i32
  }
  func.func @transform_4(%arg0: i32) -> (i32, i32, i32) {
    %c0_i32 = arith.constant 0 : i32
    %c0_i32_0 = arith.constant 0 : i32
    %c0_i32_1 = arith.constant 0 : i32
    %c0_i32_2 = arith.constant 0 : i32
    return %c0_i32, %c0_i32_0, %c0_i32_1 : i32, i32, i32
  }
  func.func @transform_5(%arg0: i32) -> (i32, i32) {
    %c0_i32 = arith.constant 0 : i32
    %c0_i32_0 = arith.constant 0 : i32
    %c0_i32_1 = arith.constant 0 : i32
    return %c0_i32, %c0_i32_0 : i32, i32
  }
  func.func @transform_6(%arg0: i32) -> (i32, i32) {
    %c0_i32 = arith.constant 0 : i32
    %c0_i32_0 = arith.constant 0 : i32
    %c0_i32_1 = arith.constant 0 : i32
    return %c0_i32, %c0_i32_0 : i32, i32
  }
  func.func @transform_7(%arg0: i32) -> (i32, i32, i32) {
    %c0_i32 = arith.constant 0 : i32
    %c0_i32_0 = arith.constant 0 : i32
    %c0_i32_1 = arith.constant 0 : i32
    return %arg0, %c0_i32, %c0_i32_0 : i32, i32, i32
  }
}

</mosaic_0001>

<llo_original>
// kernel: tpu_custom_call.1
$region0: #{tpu_custom_call.1}
  #allocation0 [shape = 'u32[]', space=smem, size = 0x4, offset = 0x4, fixed_abs, tag = 'smem constant byte address 0x4 - core index']
  #allocation1 [shape = 'u32[144,128]{1,0:T(1,128)}', space=vmem, size = 0x12000, scoped, tag = 'internal scratch']
  #allocation2 [shape = 'f32[34,128]{1,0:T(8,128)}', space=vmem, size = 0x5000, scoped, tag = 'scratch operand']
  %s0 = inlined_call_operand.vmem [shape: f32[2,34,128], index: 0, kind: input, shape index: {}]
  %s1 = inlined_call_operand.hbm [shape: f32[3,128,128], index: 1, kind: input, shape index: {}]
  %s2 = inlined_call_operand.vmem [shape: f32[1,128], index: 2, kind: input, shape index: {}]
  %s3 = inlined_call_operand.vmem [shape: f32[1,128], index: 3, kind: input, shape index: {}]
  %s4 = inlined_call_operand.hbm [shape: f32[3,128,128], index: 4, kind: input, shape index: {}]
  %s5 = inlined_call_operand.vmem [shape: f32[1,128], index: 5, kind: input, shape index: {}]
  %s6 = inlined_call_operand.vmem [shape: f32[1,128], index: 6, kind: input, shape index: {}]
  %s7 = inlined_call_operand.hbm [shape: f32[2,8,128], index: 7, kind: output, shape index: {}]
  %s8 = sld [smem:[#allocation0]]
  $region69: #{tpu_custom_call.1} parent=0
    _
  %s10 = ssub.s32 1, %s8
  %s11 = scalar_select 0, %s10, %s8
  $region1: #{tpu_custom_call.1} parent=0
    #allocation3 [shape = 'u8[196608]{0}', space=vmem, size = 0x30000, scoped, tag = 'input window, operand 1, single buffered']
    #allocation4 [shape = 's32[2]{0}', space=sflag, size = 0x8, scoped, tag = 'scoped memory for tpu_custom_call.1']
    #allocation5 [shape = 's32[2]{0}', space=sflag, size = 0x8, scoped, tag = 'scoped memory for tpu_custom_call.1']
    #allocation6 [shape = 'u8[196608]{0}', space=vmem, size = 0x30000, scoped, tag = 'input window, operand 4, single buffered']
    #allocation7 [shape = 's32[1]{0}', space=sflag, size = 0x4, scoped, tag = 'scoped memory for tpu_custom_call.1']
    #allocation8 [shape = 'u8[8192]{0}', space=vmem, size = 0x2000, scoped, tag = 'output window, operand 0']
    %12 = vsyncpa [#allocation4], 0
    %13 = vsyncpa [#allocation7], 0
    %14 = vsyncpa [#allocation5], 0
    %s15 = scalar_lea.sflag [#allocation5], 1
    %16 = vsyncpa %s15, 0
    loop: start=0, step=1, limit=4
    $region2: #{tpu_custom_call.1} parent=1 // loop_pre_header
      _
    $region3: #{tpu_custom_call.1} parent=1 // loop_header
      %s18 = sphi 0, %s22
      %p19 = scmp.ge.s32.totalorder %s18, 4
      %s28 = sphi 0, %s30
      %s31 = sphi 0, %s28
      %s32 = sphi 0, %s31
      %s48 = sphi 0, %s32
      %s52 = sphi 0, %s52
      %s54 = sphi 0, %s52
      %s55 = sphi 0, %s54
      %s69 = sphi 0, %s55
      %s73 = sphi 0, %s73
      %s75 = sphi 0, %s73
      %s76 = sphi 0, %s75
      %s90 = sphi 0, %s76
      %s94 = sphi 0, %s94
      %s96 = sphi 0, %s94
      %s97 = sphi 0, %s96
      %s111 = sphi 0, %s97
      %s115 = sphi 0, %s115
      %s117 = sphi 0, %s115
      %s118 = sphi 0, %s117
      %s132 = sphi 0, %s118
      %s136 = sphi 0, %s136
      %s138 = sphi 0, %s136
      %s139 = sphi 0, %s138
      %s153 = sphi 0, %s139
      %s157 = sphi 0, %s157
      %s159 = sphi 0, %s157
      %s160 = sphi 0, %s159
      %s174 = sphi 0, %s160
      %s180 = sphi 0, %s182
      %s183 = sphi 0, %s180
      %s184 = sphi 0, %s183
      %s200 = sphi 0, %s184
    $region4: #{tpu_custom_call.1} parent=1 // loop_header_branch
      %21 = sbr.rel (%p19) target = $region8
    $region5: #{tpu_custom_call.1} parent=1 // loop_body
      %s23 = ssub.s32 %s18, 1
      %s24 = ssub.s32 %s18, 2
      %s25 = sadd.s32 %s18, 1
      %s26 = ssub.s32 %s18, %s25
      %p27 = scmp.eq.s32.totalorder %s26, 0
      %s29 = sadd.s32 %s28, 1
      %s30 = scalar_select %p27, %s28, %s29
      %p33 = pneg %p27
      %p34 = scmp.eq.s32.totalorder %s18, 1
      %p35 = por %p33, %p34
      %p36 = scmp.ne.s32.totalorder %s28, %s31
      %p37 = scmp.eq.s32.totalorder %s18, 0
      %p38 = por %p36, %p37
      %p39 = scmp.ne.s32.totalorder %s28, %s31
      %p40 = scmp.eq.s32.totalorder %s23, 1
      %p41 = por %p39, %p40
      %p42 = scmp.ne.s32.totalorder %s31, %s32
      %p43 = scmp.eq.s32.totalorder %s23, 0
      %p44 = por %p42, %p43
      %p45 = scmp.ne.s32.totalorder %s31, %s32
      %p46 = scmp.eq.s32.totalorder %s24, 1
      %p47 = por %p45, %p46
      %p49 = scmp.ne.s32.totalorder %s32, %s48
      %p50 = scmp.eq.s32.totalorder %s24, 0
      %p51 = por %p49, %p50
      %s53 = sadd.s32 %s52, 1
      %p56 = scmp.eq.s32.totalorder %s18, 1
      %p57 = scmp.ne.s32.totalorder %s52, %s54
      %p58 = scmp.eq.s32.totalorder %s18, 0
      %p59 = por %p57, %p58
      %p60 = scmp.ne.s32.totalorder %s52, %s54
      %p61 = scmp.eq.s32.totalorder %s23, 1
      %p62 = por %p60, %p61
      %p63 = scmp.ne.s32.totalorder %s54, %s55
      %p64 = scmp.eq.s32.totalorder %s23, 0
      %p65 = por %p63, %p64
      %p66 = scmp.ne.s32.totalorder %s54, %s55
      %p67 = scmp.eq.s32.totalorder %s24, 1
      %p68 = por %p66, %p67
      %p70 = scmp.ne.s32.totalorder %s55, %s69
      %p71 = scmp.eq.s32.totalorder %s24, 0
      %p72 = por %p70, %p71
      %s74 = sadd.s32 %s73, 1
      %p77 = scmp.eq.s32.totalorder %s18, 1
      %p78 = scmp.ne.s32.totalorder %s73, %s75
      %p79 = scmp.eq.s32.totalorder %s18, 0
      %p80 = por %p78, %p79
      %p81 = scmp.ne.s32.totalorder %s73, %s75
      %p82 = scmp.eq.s32.totalorder %s23, 1
      %p83 = por %p81, %p82
      %p84 = scmp.ne.s32.totalorder %s75, %s76
      %p85 = scmp.eq.s32.totalorder %s23, 0
      %p86 = por %p84, %p85
      %p87 = scmp.ne.s32.totalorder %s75, %s76
      %p88 = scmp.eq.s32.totalorder %s24, 1
      %p89 = por %p87, %p88
      %p91 = scmp.ne.s32.totalorder %s76, %s90
      %p92 = scmp.eq.s32.totalorder %s24, 0
      %p93 = por %p91, %p92
      %s95 = sadd.s32 %s94, 1
      %p98 = scmp.eq.s32.totalorder %s18, 1
      %p99 = scmp.ne.s32.totalorder %s94, %s96
      %p100 = scmp.eq.s32.totalorder %s18, 0
      %p101 = por %p99, %p100
      %p102 = scmp.ne.s32.totalorder %s94, %s96
      %p103 = scmp.eq.s32.totalorder %s23, 1
      %p104 = por %p102, %p103
      %p105 = scmp.ne.s32.totalorder %s96, %s97
      %p106 = scmp.eq.s32.totalorder %s23, 0
      %p107 = por %p105, %p106
      %p108 = scmp.ne.s32.totalorder %s96, %s97
      %p109 = scmp.eq.s32.totalorder %s24, 1
      %p110 = por %p108, %p109
      %p112 = scmp.ne.s32.totalorder %s97, %s111
      %p113 = scmp.eq.s32.totalorder %s24, 0
      %p114 = por %p112, %p113
      %s116 = sadd.s32 %s115, 1
      %p119 = scmp.eq.s32.totalorder %s18, 1
      %p120 = scmp.ne.s32.totalorder %s115, %s117
      %p121 = scmp.eq.s32.totalorder %s18, 0
      %p122 = por %p120, %p121
      %p123 = scmp.ne.s32.totalorder %s115, %s117
      %p124 = scmp.eq.s32.totalorder %s23, 1
      %p125 = por %p123, %p124
      %p126 = scmp.ne.s32.totalorder %s117, %s118
      %p127 = scmp.eq.s32.totalorder %s23, 0
      %p128 = por %p126, %p127
      %p129 = scmp.ne.s32.totalorder %s117, %s118
      %p130 = scmp.eq.s32.totalorder %s24, 1
      %p131 = por %p129, %p130
      %p133 = scmp.ne.s32.totalorder %s118, %s132
      %p134 = scmp.eq.s32.totalorder %s24, 0
      %p135 = por %p133, %p134
      %s137 = sadd.s32 %s136, 1
      %p140 = scmp.eq.s32.totalorder %s18, 1
      %p141 = scmp.ne.s32.totalorder %s136, %s138
      %p142 = scmp.eq.s32.totalorder %s18, 0
      %p143 = por %p141, %p142
      %p144 = scmp.ne.s32.totalorder %s136, %s138
      %p145 = scmp.eq.s32.totalorder %s23, 1
      %p146 = por %p144, %p145
      %p147 = scmp.ne.s32.totalorder %s138, %s139
      %p148 = scmp.eq.s32.totalorder %s23, 0
      %p149 = por %p147, %p148
      %p150 = scmp.ne.s32.totalorder %s138, %s139
      %p151 = scmp.eq.s32.totalorder %s24, 1
      %p152 = por %p150, %p151
      %p154 = scmp.ne.s32.totalorder %s139, %s153
      %p155 = scmp.eq.s32.totalorder %s24, 0
      %p156 = por %p154, %p155
      %s158 = sadd.s32 %s157, 1
      %p161 = scmp.eq.s32.totalorder %s18, 1
      %p162 = scmp.ne.s32.totalorder %s157, %s159
      %p163 = scmp.eq.s32.totalorder %s18, 0
      %p164 = por %p162, %p163
      %p165 = scmp.ne.s32.totalorder %s157, %s159
      %p166 = scmp.eq.s32.totalorder %s23, 1
      %p167 = por %p165, %p166
      %p168 = scmp.ne.s32.totalorder %s159, %s160
      %p169 = scmp.eq.s32.totalorder %s23, 0
      %p170 = por %p168, %p169
      %p171 = scmp.ne.s32.totalorder %s159, %s160
      %p172 = scmp.eq.s32.totalorder %s24, 1
      %p173 = por %p171, %p172
      %p175 = scmp.ne.s32.totalorder %s160, %s174
      %p176 = scmp.eq.s32.totalorder %s24, 0
      %p177 = por %p175, %p176
      %s178 = ssub.s32 %s18, %s25
      %p179 = scmp.eq.s32.totalorder %s178, 0
      %s181 = sadd.s32 %s180, 1
      %s182 = scalar_select %p179, %s180, %s181
      %p185 = pneg %p179
      %p186 = scmp.eq.s32.totalorder %s18, 1
      %p187 = por %p185, %p186
      %p188 = scmp.ne.s32.totalorder %s180, %s183
      %p189 = scmp.eq.s32.totalorder %s18, 0
      %p190 = por %p188, %p189
      %p191 = scmp.ne.s32.totalorder %s180, %s183
      %p192 = scmp.eq.s32.totalorder %s23, 1
      %p193 = por %p191, %p192
      %p194 = scmp.ne.s32.totalorder %s183, %s184
      %p195 = scmp.eq.s32.totalorder %s23, 0
      %p196 = por %p194, %p195
      %p197 = scmp.ne.s32.totalorder %s183, %s184
      %p198 = scmp.eq.s32.totalorder %s24, 1
      %p199 = por %p197, %p198
      %p201 = scmp.ne.s32.totalorder %s184, %s200
      %p202 = scmp.eq.s32.totalorder %s24, 0
      %p203 = por %p201, %p202
      %p204 = scmp.le.s32.totalorder 1, %s18
      %p205 = scmp.lt.s32.totalorder %s18, 3
      %p206 = pnand %p204, %p205
      %p207 = pneg %p206
      // Predicated region
      $region9: #{tpu_custom_call.1} parent=5 // pred_check
        _
      $region10: #{tpu_custom_call.1} parent=5 // pred_check_branch
        %209 = sbr.rel (%p206) target = $region12
      $region11: #{tpu_custom_call.1} parent=5 // pred_region
        %s210 = ssub.s32 %s18, 1
        // Predicated region
        $region13: #{tpu_custom_call.1} parent=11 // pred_check
          %p211 = pneg %p65
        $region14: #{tpu_custom_call.1} parent=11 // pred_check_branch
          %213 = sbr.rel (%p211) target = $region16
        $region15: #{tpu_custom_call.1} parent=11 // pred_region
          %s215 = ssub.s32 6144, 6144
          %216 = vsyncadd [#allocation4], %s215
          %s217 = sshll.u32 [#allocation3], 4
          %s218 = int_to_ptr.vmem [resolvable:$true] %s217
          %223 = dma.hbm_to_vmem [thread:$0]  %s1, 6144, %s218, [#allocation4], 128, 128, 8
        $region16: #{tpu_custom_call.1} parent=11 // pred_fallthru
          _
        // Predicated region
        $region17: #{tpu_custom_call.1} parent=11 // pred_check
          %p224 = pneg %p86
        $region18: #{tpu_custom_call.1} parent=11 // pred_check_branch
          %226 = sbr.rel (%p224) target = $region20
        $region19: #{tpu_custom_call.1} parent=11 // pred_region
          _
        $region20: #{tpu_custom_call.1} parent=11 // pred_fallthru
          _
        // Predicated region
        $region21: #{tpu_custom_call.1} parent=11 // pred_check
          %p227 = pneg %p107
        $region22: #{tpu_custom_call.1} parent=11 // pred_check_branch
          %229 = sbr.rel (%p227) target = $region24
        $region23: #{tpu_custom_call.1} parent=11 // pred_region
          _
        $region24: #{tpu_custom_call.1} parent=11 // pred_fallthru
          _
        // Predicated region
        $region25: #{tpu_custom_call.1} parent=11 // pred_check
          %p230 = pneg %p128
        $region26: #{tpu_custom_call.1} parent=11 // pred_check_branch
          %232 = sbr.rel (%p230) target = $region28
        $region27: #{tpu_custom_call.1} parent=11 // pred_region
          %s234 = ssub.s32 6144, 6144
          %235 = vsyncadd [#allocation7], %s234
          %s236 = sshll.u32 [#allocation6], 4
          %s237 = int_to_ptr.vmem [resolvable:$true] %s236
          %242 = dma.hbm_to_vmem [thread:$0]  %s4, 6144, %s237, [#allocation7], 128, 128, 8
        $region28: #{tpu_custom_call.1} parent=11 // pred_fallthru
          _
        // Predicated region
        $region29: #{tpu_custom_call.1} parent=11 // pred_check
          %p243 = pneg %p149
        $region30: #{tpu_custom_call.1} parent=11 // pred_check_branch
          %245 = sbr.rel (%p243) target = $region32
        $region31: #{tpu_custom_call.1} parent=11 // pred_region
          _
        $region32: #{tpu_custom_call.1} parent=11 // pred_fallthru
          _
        // Predicated region
        $region33: #{tpu_custom_call.1} parent=11 // pred_check
          %p246 = pneg %p170
        $region34: #{tpu_custom_call.1} parent=11 // pred_check_branch
          %248 = sbr.rel (%p246) target = $region36
        $region35: #{tpu_custom_call.1} parent=11 // pred_region
          _
        $region36: #{tpu_custom_call.1} parent=11 // pred_fallthru
          _
      $region12: #{tpu_custom_call.1} parent=5 // pred_fallthru
        _
      %p249 = scmp.lt.s32.totalorder %s18, 2
      // Predicated region
      $region37: #{tpu_custom_call.1} parent=5 // pred_check
        %p250 = pneg %p249
      $region38: #{tpu_custom_call.1} parent=5 // pred_check_branch
        %252 = sbr.rel (%p250) target = $region40
      $region39: #{tpu_custom_call.1} parent=5 // pred_region
        // Predicated region
        $region41: #{tpu_custom_call.1} parent=39 // pred_check
          %p253 = pneg %p38
        $region42: #{tpu_custom_call.1} parent=39 // pred_check_branch
          %255 = sbr.rel (%p253) target = $region44
        $region43: #{tpu_custom_call.1} parent=39 // pred_region
          %p256 = scmp.lt.s32.totalorder %s18, 1
          %s257 = scalar_select %p256, %s18, 1
          %s258 = smul.addr %s257, 5
          %s259 = smul.addr %s258, 8
          %s260 = scalar_lea.vmem %s0, %s259
        $region44: #{tpu_custom_call.1} parent=39 // pred_fallthru
          _
      $region40: #{tpu_custom_call.1} parent=5 // pred_fallthru
        _
      %p261 = scmp.le.s32.totalorder 1, %s18
      %p262 = scmp.lt.s32.totalorder %s18, 3
      %p263 = pnand %p261, %p262
      %p264 = pneg %p263
      // Predicated region
      $region45: #{tpu_custom_call.1} parent=5 // pred_check
        _
      $region46: #{tpu_custom_call.1} parent=5 // pred_check_branch
        %266 = sbr.rel (%p263) target = $region48
      $region47: #{tpu_custom_call.1} parent=5 // pred_region
        %s267 = ssub.s32 %s18, 1
        // Predicated region
        $region49: #{tpu_custom_call.1} parent=47 // pred_check
          %p268 = pneg %p65
        $region50: #{tpu_custom_call.1} parent=47 // pred_check_branch
          %270 = sbr.rel (%p268) target = $region52
        $region51: #{tpu_custom_call.1} parent=47 // pred_region
          %271 = dma.done [#allocation4], 6144
        $region52: #{tpu_custom_call.1} parent=47 // pred_fallthru
          _
        // Predicated region
        $region53: #{tpu_custom_call.1} parent=47 // pred_check
          %p272 = pneg %p128
        $region54: #{tpu_custom_call.1} parent=47 // pred_check_branch
          %274 = sbr.rel (%p272) target = $region56
        $region55: #{tpu_custom_call.1} parent=47 // pred_region
          %275 = dma.done [#allocation7], 6144
        $region56: #{tpu_custom_call.1} parent=47 // pred_fallthru
          _
        %p276 = scmp.lt.s32.totalorder %s23, 1
        %s277 = scalar_select %p276, %s23, 1
        %s278 = smul.addr %s277, 5
        %s279 = smul.addr %s278, 8
        %s280 = scalar_lea.vmem %s0, %s279
        %p281 = pneg %p44
        %p282 = pneg %p41
        %p283 = pneg %p65
        %p284 = pneg %p62
        %p285 = pneg %p86
        %p286 = pneg %p83
        %p287 = pneg %p107
        %p288 = pneg %p104
        %p289 = pneg %p128
        %p290 = pneg %p125
        %p291 = pneg %p149
        %p292 = pneg %p146
        %p293 = pneg %p170
        %p294 = pneg %p167
        %p295 = pneg %p196
        %p296 = pneg %p193
        %s297 = sand.u32 %s183, 1
        %s298 = scalar_lea.sflag [#allocation5], %s297
        %s299 = sand.u32 %s183, 1
        %s300 = smul.addr %s299, 8
        %s301 = scalar_lea.vmem [#allocation8], %s300
        %p302 = scmp.lt.s32.totalorder %s23, 1
        %s303 = scalar_select %p302, %s23, 1
        %s304 = smul.addr %s303, 5
        %s305 = smul.addr %s304, 8
        %s306 = scalar_lea.vmem %s0, %s305
        %307 = vst [vmem:[#allocation2] sm:$0xff] 0.0
        %308 = vst [vmem:[#allocation2 + $0x1a] sm:$0xff] 0.0
        %v309 = vld [vmem:[%s306 + $0x7] sm:$0xff]
        %v310 = vld [vmem:[%s306 + $0xf] sm:$0xff]
        %v311 = vld [vmem:[%s306 + $0x17] sm:$0x3]
        %v312 = vld [vmem:[#allocation3] sm:$0xff]
        %v313 = vld [vmem:[#allocation3 + $0x8] sm:$0xff]
        %v314 = vld [vmem:[#allocation3 + $0x10] sm:$0xff]
        %v315 = vld [vmem:[#allocation3 + $0x18] sm:$0xff]
        %v316 = vld [vmem:[#allocation3 + $0x20] sm:$0xff]
        %v317 = vld [vmem:[#allocation3 + $0x28] sm:$0xff]
        %v318 = vld [vmem:[#allocation3 + $0x30] sm:$0xff]
        %v319 = vld [vmem:[#allocation3 + $0x38] sm:$0xff]
        %v320 = vld [vmem:[#allocation3 + $0x40] sm:$0xff]
        %v321 = vld [vmem:[#allocation3 + $0x48] sm:$0xff]
        %v322 = vld [vmem:[#allocation3 + $0x50] sm:$0xff]
        %v323 = vld [vmem:[#allocation3 + $0x58] sm:$0xff]
        %v324 = vld [vmem:[#allocation3 + $0x60] sm:$0xff]
        %v325 = vld [vmem:[#allocation3 + $0x68] sm:$0xff]
        %v326 = vld [vmem:[#allocation3 + $0x70] sm:$0xff]
        %v327 = vld [vmem:[#allocation3 + $0x78] sm:$0xff]
        %v328 = vld [vmem:[%s306 + $0x8] sm:$0xff]
        %v329 = vld [vmem:[%s306 + $0x10] sm:$0xff]
        %v330 = vld [vmem:[%s306 + $0x18] sm:$0x3]
        %s331 = scalar_lea.vmem [#allocation3], 128
        %v332 = vld [vmem:[%s331] sm:$0xff]
        %v333 = vld [vmem:[%s331 + $0x8] sm:$0xff]
        %v334 = vld [vmem:[%s331 + $0x10] sm:$0xff]
        %v335 = vld [vmem:[%s331 + $0x18] sm:$0xff]
        %v336 = vld [vmem:[%s331 + $0x20] sm:$0xff]
        %v337 = vld [vmem:[%s331 + $0x28] sm:$0xff]
        %v338 = vld [vmem:[%s331 + $0x30] sm:$0xff]
        %v339 = vld [vmem:[%s331 + $0x38] sm:$0xff]
        %v340 = vld [vmem:[%s331 + $0x40] sm:$0xff]
        %v341 = vld [vmem:[%s331 + $0x48] sm:$0xff]
        %v342 = vld [vmem:[%s331 + $0x50] sm:$0xff]
        %v343 = vld [vmem:[%s331 + $0x58] sm:$0xff]
        %v344 = vld [vmem:[%s331 + $0x60] sm:$0xff]
        %v345 = vld [vmem:[%s331 + $0x68] sm:$0xff]
        %v346 = vld [vmem:[%s331 + $0x70] sm:$0xff]
        %v347 = vld [vmem:[%s331 + $0x78] sm:$0xff]
        %348 = vmatprep.subr.mxu0 0.0
        %349 = vmatpush1.msra.mxu0 %v347
        %350 = vmatprep.subr.mxu0 0.0
        %351 = vmatpush1.msra.mxu0 %v346
        %352 = vmatprep.subr.mxu0 0.0
        %353 = vmatpush1.msra.mxu0 %v345
        %354 = vmatprep.subr.mxu0 0.0
        %355 = vmatpush1.msra.mxu0 %v344
        %356 = vmatprep.subr.mxu0 0.0
        %357 = vmatpush1.msra.mxu0 %v343
        %358 = vmatprep.subr.mxu0 0.0
        %359 = vmatpush1.msra.mxu0 %v342
        %360 = vmatprep.subr.mxu0 0.0
        %361 = vmatpush1.msra.mxu0 %v341
        %362 = vmatprep.subr.mxu0 0.0
        %363 = vmatpush1.msra.mxu0 %v340
        %364 = vmatprep.subr.mxu0 0.0
        %365 = vmatpush1.msra.mxu0 %v339
        %366 = vmatprep.subr.mxu0 0.0
        %367 = vmatpush1.msra.mxu0 %v338
        %368 = vmatprep.subr.mxu0 0.0
        %369 = vmatpush1.msra.mxu0 %v337
        %370 = vmatprep.subr.mxu0 0.0
        %371 = vmatpush1.msra.mxu0 %v336
        %372 = vmatprep.subr.mxu0 0.0
        %373 = vmatpush1.msra.mxu0 %v335
        %374 = vmatprep.subr.mxu0 0.0
        %375 = vmatpush1.msra.mxu0 %v334
        %376 = vmatprep.subr.mxu0 0.0
        %377 = vmatpush1.msra.mxu0 %v333
        %378 = vmatprep.subr.mxu0 0.0
        %379 = vmatpush1.msra.mxu0 %v332
        %380 = vmatprep.subr.mxu0 0.0
        %381 = vmatpush2.msra.mxu0 0.0
        %382 = vmatprep.subr.mxu0 0.0
        %383 = vmatpush2.msra.mxu0 0.0
        %384 = vmatprep.subr.mxu0 0.0
        %385 = vmatpush2.msra.mxu0 0.0
        %386 = vmatprep.subr.mxu0 0.0
        %387 = vmatpush2.msra.mxu0 0.0
        %388 = vmatprep.subr.mxu0 0.0
        %389 = vmatpush2.msra.mxu0 0.0
        %390 = vmatprep.subr.mxu0 0.0
        %391 = vmatpush2.msra.mxu0 0.0
        %392 = vmatprep.subr.mxu0 0.0
        %393 = vmatpush2.msra.mxu0 0.0
        %394 = vmatprep.subr.mxu0 0.0
        %395 = vmatpush2.msra.mxu0 0.0
        %396 = vmatprep.subr.mxu0 0.0
        %397 = vmatpush2.msra.mxu0 0.0
        %398 = vmatprep.subr.mxu0 0.0
        %399 = vmatpush2.msra.mxu0 0.0
        %400 = vmatprep.subr.mxu0 0.0
        %401 = vmatpush2.msra.mxu0 0.0
        %402 = vmatprep.subr.mxu0 0.0
        %403 = vmatpush2.msra.mxu0 0.0
        %404 = vmatprep.subr.mxu0 0.0
        %405 = vmatpush2.msra.mxu0 0.0
        %406 = vmatprep.subr.mxu0 0.0
        %407 = vmatpush2.msra.mxu0 0.0
        %408 = vmatprep.subr.mxu0 0.0
        %409 = vmatpush2.msra.mxu0 0.0
        %410 = vmatprep.subr.mxu0 0.0
        %411 = vmatpush2.msra.mxu0 0.0
        %412 = vmatprep.mubr.f32.mxu0 0.0
        %413 = vmatmul.mubr.f32.gmra.mxu0 %v328
        %v414 = vpop.f32.mrf.mxu0
        %v415 = vadd.f32 0.0, %v414
        %v416 = vpop.f32.mrf.mxu0
        %417 = vmatprep.mubr.f32.mxu0 0.0
        %418 = vmatmul.mubr.f32.gmra.mxu0 %v329
        %v419 = vpop.f32.mrf.mxu0
        %v420 = vadd.f32 0.0, %v419
        %v421 = vpop.f32.mrf.mxu0
        %422 = vmatprep.mubr.f32.mxu0 0.0
        %423 = vmatmul.mubr.f32.gmra.mxu0 %v330
        %v424 = vpop.f32.mrf.mxu0
        %v425 = vadd.f32 0.0, %v424
        %v426 = vpop.f32.mrf.mxu0
        %427 = vdwg.mxu0
        %428 = vmatprep.subr.mxu0 0.0
        %429 = vmatpush1.msra.mxu0 %v327
        %430 = vmatprep.subr.mxu0 0.0
        %431 = vmatpush1.msra.mxu0 %v326
        %432 = vmatprep.subr.mxu0 0.0
        %433 = vmatpush1.msra.mxu0 %v325
        %434 = vmatprep.subr.mxu0 0.0
        %435 = vmatpush1.msra.mxu0 %v324
        %436 = vmatprep.subr.mxu0 0.0
        %437 = vmatpush1.msra.mxu0 %v323
        %438 = vmatprep.subr.mxu0 0.0
        %439 = vmatpush1.msra.mxu0 %v322
        %440 = vmatprep.subr.mxu0 0.0
        %441 = vmatpush1.msra.mxu0 %v321
        %442 = vmatprep.subr.mxu0 0.0
        %443 = vmatpush1.msra.mxu0 %v320
        %444 = vmatprep.subr.mxu0 0.0
        %445 = vmatpush1.msra.mxu0 %v319
        %446 = vmatprep.subr.mxu0 0.0
        %447 = vmatpush1.msra.mxu0 %v318
        %448 = vmatprep.subr.mxu0 0.0
        %449 = vmatpush1.msra.mxu0 %v317
        %450 = vmatprep.subr.mxu0 0.0
        %451 = vmatpush1.msra.mxu0 %v316
        %452 = vmatprep.subr.mxu0 0.0
        %453 = vmatpush1.msra.mxu0 %v315
        %454 = vmatprep.subr.mxu0 0.0
        %455 = vmatpush1.msra.mxu0 %v314
        %456 = vmatprep.subr.mxu0 0.0
        %457 = vmatpush1.msra.mxu0 %v313
        %458 = vmatprep.subr.mxu0 0.0
        %459 = vmatpush1.msra.mxu0 %v312
        %460 = vmatprep.subr.mxu0 0.0
        %461 = vmatpush2.msra.mxu0 0.0
        %462 = vmatprep.subr.mxu0 0.0
        %463 = vmatpush2.msra.mxu0 0.0
        %464 = vmatprep.subr.mxu0 0.0
        %465 = vmatpush2.msra.mxu0 0.0
        %466 = vmatprep.subr.mxu0 0.0
        %467 = vmatpush2.msra.mxu0 0.0
        %468 = vmatprep.subr.mxu0 0.0
        %469 = vmatpush2.msra.mxu0 0.0
        %470 = vmatprep.subr.mxu0 0.0
        %471 = vmatpush2.msra.mxu0 0.0
        %472 = vmatprep.subr.mxu0 0.0
        %473 = vmatpush2.msra.mxu0 0.0
        %474 = vmatprep.subr.mxu0 0.0
        %475 = vmatpush2.msra.mxu0 0.0
        %476 = vmatprep.subr.mxu0 0.0
        %477 = vmatpush2.msra.mxu0 0.0
        %478 = vmatprep.subr.mxu0 0.0
        %479 = vmatpush2.msra.mxu0 0.0
        %480 = vmatprep.subr.mxu0 0.0
        %481 = vmatpush2.msra.mxu0 0.0
        %482 = vmatprep.subr.mxu0 0.0
        %483 = vmatpush2.msra.mxu0 0.0
        %484 = vmatprep.subr.mxu0 0.0
        %485 = vmatpush2.msra.mxu0 0.0
        %486 = vmatprep.subr.mxu0 0.0
        %487 = vmatpush2.msra.mxu0 0.0
        %488 = vmatprep.subr.mxu0 0.0
        %489 = vmatpush2.msra.mxu0 0.0
        %490 = vmatprep.subr.mxu0 0.0
        %491 = vmatpush2.msra.mxu0 0.0
        %492 = vmatprep.mubr.f32.mxu0 0.0
        %493 = vmatmul.mubr.f32.gmra.mxu0 %v309
        %v494 = vpop.f32.mrf.mxu0
        %v495 = vadd.f32 %v415, %v494
        %v496 = vpop.f32.mrf.mxu0
        %497 = vmatprep.mubr.f32.mxu0 0.0
        %498 = vmatmul.mubr.f32.gmra.mxu0 %v310
        %v499 = vpop.f32.mrf.mxu0
        %v500 = vadd.f32 %v420, %v499
        %v501 = vpop.f32.mrf.mxu0
        %502 = vmatprep.mubr.f32.mxu0 0.0
        %503 = vmatmul.mubr.f32.gmra.mxu0 %v311
        %v504 = vpop.f32.mrf.mxu0
        %v505 = vadd.f32 %v425, %v504
        %v506 = vpop.f32.mrf.mxu0
        %507 = vdwg.mxu0
        %v508 = vld [vmem:[%s306 + $0x9] sm:$0xff]
        %v509 = vld [vmem:[%s306 + $0x11] sm:$0xff]
        %v510 = vld [vmem:[%s306 + $0x19] sm:$0x3]
        %s511 = scalar_lea.vmem [#allocation3], 256
        %v512 = vld [vmem:[%s511] sm:$0xff]
        %v513 = vld [vmem:[%s511 + $0x8] sm:$0xff]
        %v514 = vld [vmem:[%s511 + $0x10] sm:$0xff]
        %v515 = vld [vmem:[%s511 + $0x18] sm:$0xff]
        %v516 = vld [vmem:[%s511 + $0x20] sm:$0xff]
        %v517 = vld [vmem:[%s511 + $0x28] sm:$0xff]
        %v518 = vld [vmem:[%s511 + $0x30] sm:$0xff]
        %v519 = vld [vmem:[%s511 + $0x38] sm:$0xff]
        %v520 = vld [vmem:[%s511 + $0x40] sm:$0xff]
        %v521 = vld [vmem:[%s511 + $0x48] sm:$0xff]
        %v522 = vld [vmem:[%s511 + $0x50] sm:$0xff]
        %v523 = vld [vmem:[%s511 + $0x58] sm:$0xff]
        %v524 = vld [vmem:[%s511 + $0x60] sm:$0xff]
        %v525 = vld [vmem:[%s511 + $0x68] sm:$0xff]
        %v526 = vld [vmem:[%s511 + $0x70] sm:$0xff]
        %v527 = vld [vmem:[%s511 + $0x78] sm:$0xff]
        %528 = vmatprep.subr.mxu0 0.0
        %529 = vmatpush1.msra.mxu0 %v527
        %530 = vmatprep.subr.mxu0 0.0
        %531 = vmatpush1.msra.mxu0 %v526
        %532 = vmatprep.subr.mxu0 0.0
        %533 = vmatpush1.msra.mxu0 %v525
        %534 = vmatprep.subr.mxu0 0.0
        %535 = vmatpush1.msra.mxu0 %v524
        %536 = vmatprep.subr.mxu0 0.0
        %537 = vmatpush1.msra.mxu0 %v523
        %538 = vmatprep.subr.mxu0 0.0
        %539 = vmatpush1.msra.mxu0 %v522
        %540 = vmatprep.subr.mxu0 0.0
        %541 = vmatpush1.msra.mxu0 %v521
        %542 = vmatprep.subr.mxu0 0.0
        %543 = vmatpush1.msra.mxu0 %v520
        %544 = vmatprep.subr.mxu0 0.0
        %545 = vmatpush1.msra.mxu0 %v519
        %546 = vmatprep.subr.mxu0 0.0
        %547 = vmatpush1.msra.mxu0 %v518
        %548 = vmatprep.subr.mxu0 0.0
        %549 = vmatpush1.msra.mxu0 %v517
        %550 = vmatprep.subr.mxu0 0.0
        %551 = vmatpush1.msra.mxu0 %v516
        %552 = vmatprep.subr.mxu0 0.0
        %553 = vmatpush1.msra.mxu0 %v515
        %554 = vmatprep.subr.mxu0 0.0
        %555 = vmatpush1.msra.mxu0 %v514
        %556 = vmatprep.subr.mxu0 0.0
        %557 = vmatpush1.msra.mxu0 %v513
        %558 = vmatprep.subr.mxu0 0.0
        %559 = vmatpush1.msra.mxu0 %v512
        %560 = vmatprep.subr.mxu0 0.0
        %561 = vmatpush2.msra.mxu0 0.0
        %562 = vmatprep.subr.mxu0 0.0
        %563 = vmatpush2.msra.mxu0 0.0
        %564 = vmatprep.subr.mxu0 0.0
        %565 = vmatpush2.msra.mxu0 0.0
        %566 = vmatprep.subr.mxu0 0.0
        %567 = vmatpush2.msra.mxu0 0.0
        %568 = vmatprep.subr.mxu0 0.0
        %569 = vmatpush2.msra.mxu0 0.0
        %570 = vmatprep.subr.mxu0 0.0
        %571 = vmatpush2.msra.mxu0 0.0
        %572 = vmatprep.subr.mxu0 0.0
        %573 = vmatpush2.msra.mxu0 0.0
        %574 = vmatprep.subr.mxu0 0.0
        %575 = vmatpush2.msra.mxu0 0.0
        %576 = vmatprep.subr.mxu0 0.0
        %577 = vmatpush2.msra.mxu0 0.0
        %578 = vmatprep.subr.mxu0 0.0
        %579 = vmatpush2.msra.mxu0 0.0
        %580 = vmatprep.subr.mxu0 0.0
        %581 = vmatpush2.msra.mxu0 0.0
        %582 = vmatprep.subr.mxu0 0.0
        %583 = vmatpush2.msra.mxu0 0.0
        %584 = vmatprep.subr.mxu0 0.0
        %585 = vmatpush2.msra.mxu0 0.0
        %586 = vmatprep.subr.mxu0 0.0
        %587 = vmatpush2.msra.mxu0 0.0
        %588 = vmatprep.subr.mxu0 0.0
        %589 = vmatpush2.msra.mxu0 0.0
        %590 = vmatprep.subr.mxu0 0.0
        %591 = vmatpush2.msra.mxu0 0.0
        %592 = vmatprep.mubr.f32.mxu0 0.0
        %593 = vmatmul.mubr.f32.gmra.mxu0 %v508
        %v594 = vpop.f32.mrf.mxu0
        %v595 = vadd.f32 0.0, %v594
        %v596 = vpop.f32.mrf.mxu0
        %597 = vmatprep.mubr.f32.mxu0 0.0
        %598 = vmatmul.mubr.f32.gmra.mxu0 %v509
        %v599 = vpop.f32.mrf.mxu0
        %v600 = vadd.f32 0.0, %v599
        %v601 = vpop.f32.mrf.mxu0
        %602 = vmatprep.mubr.f32.mxu0 0.0
        %603 = vmatmul.mubr.f32.gmra.mxu0 %v510
        %v604 = vpop.f32.mrf.mxu0
        %v605 = vadd.f32 0.0, %v604
        %v606 = vpop.f32.mrf.mxu0
        %607 = vdwg.mxu0
        %v608 = vadd.f32 %v495, %v595
        %v609 = vadd.f32 %v500, %v600
        %v610 = vadd.f32 %v505, %v605
        %v611 = vld [vmem:[%s2] sm:$0x1]
        %v613 = vlaneseq
        %v614 = vshrl.u32 %v613, 7
        %v615 = vsub.s32 0, %v614
        %v616 = vrot.slane %v611, %v615
        %v618 = vmul.f32 %v608, %v616
        %v619 = vmul.f32 %v609, %v616
        %v620 = vmul.f32 %v610, %v616
        %v621 = vld [vmem:[%s3] sm:$0x1]
        %v623 = vlaneseq
        %v624 = vshrl.u32 %v623, 7
        %v625 = vsub.s32 0, %v624
        %v626 = vrot.slane %v621, %v625
        %v628 = vadd.f32 %v618, %v626
        %v629 = vadd.f32 %v619, %v626
        %v630 = vadd.f32 %v620, %v626
        %v631 = vmax.f32 %v628, 0.0
        %v632 = vmax.f32 %v629, 0.0
        %v633 = vmax.f32 %v630, 0.0
        %634 = vst [vmem:[#allocation2 + $0x8] sm:$0xff] %v631
        %635 = vst [vmem:[#allocation2 + $0x10] sm:$0xff] %v632
        %636 = vst [vmem:[#allocation2 + $0x18] sm:$0x3] %v633
        %637 = vst [vmem:[#allocation2 + $0x8] sm:$0x1] 0.0
        %638 = vst [vmem:[#allocation2 + $0x19] sm:$0x1] 0.0
        %v639 = vld [vmem:[#allocation2 + $0x7] sm:$0xff]
        %v640 = vld [vmem:[#allocation2 + $0xf] sm:$0xff]
        %v641 = vld [vmem:[#allocation2 + $0x17] sm:$0x3]
        %v642 = vld [vmem:[#allocation6] sm:$0xff]
        %v643 = vld [vmem:[#allocation6 + $0x8] sm:$0xff]
        %v644 = vld [vmem:[#allocation6 + $0x10] sm:$0xff]
        %v645 = vld [vmem:[#allocation6 + $0x18] sm:$0xff]
        %v646 = vld [vmem:[#allocation6 + $0x20] sm:$0xff]
        %v647 = vld [vmem:[#allocation6 + $0x28] sm:$0xff]
        %v648 = vld [vmem:[#allocation6 + $0x30] sm:$0xff]
        %v649 = vld [vmem:[#allocation6 + $0x38] sm:$0xff]
        %v650 = vld [vmem:[#allocation6 + $0x40] sm:$0xff]
        %v651 = vld [vmem:[#allocation6 + $0x48] sm:$0xff]
        %v652 = vld [vmem:[#allocation6 + $0x50] sm:$0xff]
        %v653 = vld [vmem:[#allocation6 + $0x58] sm:$0xff]
        %v654 = vld [vmem:[#allocation6 + $0x60] sm:$0xff]
        %v655 = vld [vmem:[#allocation6 + $0x68] sm:$0xff]
        %v656 = vld [vmem:[#allocation6 + $0x70] sm:$0xff]
        %v657 = vld [vmem:[#allocation6 + $0x78] sm:$0xff]
        %v658 = vld [vmem:[#allocation2 + $0x8] sm:$0xff]
        %v659 = vld [vmem:[#allocation2 + $0x10] sm:$0xff]
        %v660 = vld [vmem:[#allocation2 + $0x18] sm:$0x3]
        %s661 = scalar_lea.vmem [#allocation6], 128
        %v662 = vld [vmem:[%s661] sm:$0xff]
        %v663 = vld [vmem:[%s661 + $0x8] sm:$0xff]
        %v664 = vld [vmem:[%s661 + $0x10] sm:$0xff]
        %v665 = vld [vmem:[%s661 + $0x18] sm:$0xff]
        %v666 = vld [vmem:[%s661 + $0x20] sm:$0xff]
        %v667 = vld [vmem:[%s661 + $0x28] sm:$0xff]
        %v668 = vld [vmem:[%s661 + $0x30] sm:$0xff]
        %v669 = vld [vmem:[%s661 + $0x38] sm:$0xff]
        %v670 = vld [vmem:[%s661 + $0x40] sm:$0xff]
        %v671 = vld [vmem:[%s661 + $0x48] sm:$0xff]
        %v672 = vld [vmem:[%s661 + $0x50] sm:$0xff]
        %v673 = vld [vmem:[%s661 + $0x58] sm:$0xff]
        %v674 = vld [vmem:[%s661 + $0x60] sm:$0xff]
        %v675 = vld [vmem:[%s661 + $0x68] sm:$0xff]
        %v676 = vld [vmem:[%s661 + $0x70] sm:$0xff]
        %v677 = vld [vmem:[%s661 + $0x78] sm:$0xff]
        %678 = vmatprep.subr.mxu0 0.0
        %679 = vmatpush1.msra.mxu0 %v677
        %680 = vmatprep.subr.mxu0 0.0
        %681 = vmatpush1.msra.mxu0 %v676
        %682 = vmatprep.subr.mxu0 0.0
        %683 = vmatpush1.msra.mxu0 %v675
        %684 = vmatprep.subr.mxu0 0.0
        %685 = vmatpush1.msra.mxu0 %v674
        %686 = vmatprep.subr.mxu0 0.0
        %687 = vmatpush1.msra.mxu0 %v673
        %688 = vmatprep.subr.mxu0 0.0
        %689 = vmatpush1.msra.mxu0 %v672
        %690 = vmatprep.subr.mxu0 0.0
        %691 = vmatpush1.msra.mxu0 %v671
        %692 = vmatprep.subr.mxu0 0.0
        %693 = vmatpush1.msra.mxu0 %v670
        %694 = vmatprep.subr.mxu0 0.0
        %695 = vmatpush1.msra.mxu0 %v669
        %696 = vmatprep.subr.mxu0 0.0
        %697 = vmatpush1.msra.mxu0 %v668
        %698 = vmatprep.subr.mxu0 0.0
        %699 = vmatpush1.msra.mxu0 %v667
        %700 = vmatprep.subr.mxu0 0.0
        %701 = vmatpush1.msra.mxu0 %v666
        %702 = vmatprep.subr.mxu0 0.0
        %703 = vmatpush1.msra.mxu0 %v665
        %704 = vmatprep.subr.mxu0 0.0
        %705 = vmatpush1.msra.mxu0 %v664
        %706 = vmatprep.subr.mxu0 0.0
        %707 = vmatpush1.msra.mxu0 %v663
        %708 = vmatprep.subr.mxu0 0.0
        %709 = vmatpush1.msra.mxu0 %v662
        %710 = vmatprep.subr.mxu0 0.0
        %711 = vmatpush2.msra.mxu0 0.0
        %712 = vmatprep.subr.mxu0 0.0
        %713 = vmatpush2.msra.mxu0 0.0
        %714 = vmatprep.subr.mxu0 0.0
        %715 = vmatpush2.msra.mxu0 0.0
        %716 = vmatprep.subr.mxu0 0.0
        %717 = vmatpush2.msra.mxu0 0.0
        %718 = vmatprep.subr.mxu0 0.0
        %719 = vmatpush2.msra.mxu0 0.0
        %720 = vmatprep.subr.mxu0 0.0
        %721 = vmatpush2.msra.mxu0 0.0
        %722 = vmatprep.subr.mxu0 0.0
        %723 = vmatpush2.msra.mxu0 0.0
        %724 = vmatprep.subr.mxu0 0.0
        %725 = vmatpush2.msra.mxu0 0.0
        %726 = vmatprep.subr.mxu0 0.0
        %727 = vmatpush2.msra.mxu0 0.0
        %728 = vmatprep.subr.mxu0 0.0
        %729 = vmatpush2.msra.mxu0 0.0
        %730 = vmatprep.subr.mxu0 0.0
        %731 = vmatpush2.msra.mxu0 0.0
        %732 = vmatprep.subr.mxu0 0.0
        %733 = vmatpush2.msra.mxu0 0.0
        %734 = vmatprep.subr.mxu0 0.0
        %735 = vmatpush2.msra.mxu0 0.0
        %736 = vmatprep.subr.mxu0 0.0
        %737 = vmatpush2.msra.mxu0 0.0
        %738 = vmatprep.subr.mxu0 0.0
        %739 = vmatpush2.msra.mxu0 0.0
        %740 = vmatprep.subr.mxu0 0.0
        %741 = vmatpush2.msra.mxu0 0.0
        %742 = vmatprep.mubr.f32.mxu0 0.0
        %743 = vmatmul.mubr.f32.gmra.mxu0 %v658
        %v744 = vpop.f32.mrf.mxu0
        %v745 = vadd.f32 0.0, %v744
        %v746 = vpop.f32.mrf.mxu0
        %747 = vmatprep.mubr.f32.mxu0 0.0
        %748 = vmatmul.mubr.f32.gmra.mxu0 %v659
        %v749 = vpop.f32.mrf.mxu0
        %v750 = vadd.f32 0.0, %v749
        %v751 = vpop.f32.mrf.mxu0
        %752 = vmatprep.mubr.f32.mxu0 0.0
        %753 = vmatmul.mubr.f32.gmra.mxu0 %v660
        %v754 = vpop.f32.mrf.mxu0
        %v755 = vadd.f32 0.0, %v754
        %v756 = vpop.f32.mrf.mxu0
        %757 = vdwg.mxu0
        %758 = vmatprep.subr.mxu0 0.0
        %759 = vmatpush1.msra.mxu0 %v657
        %760 = vmatprep.subr.mxu0 0.0
        %761 = vmatpush1.msra.mxu0 %v656
        %762 = vmatprep.subr.mxu0 0.0
        %763 = vmatpush1.msra.mxu0 %v655
        %764 = vmatprep.subr.mxu0 0.0
        %765 = vmatpush1.msra.mxu0 %v654
        %766 = vmatprep.subr.mxu0 0.0
        %767 = vmatpush1.msra.mxu0 %v653
        %768 = vmatprep.subr.mxu0 0.0
        %769 = vmatpush1.msra.mxu0 %v652
        %770 = vmatprep.subr.mxu0 0.0
        %771 = vmatpush1.msra.mxu0 %v651
        %772 = vmatprep.subr.mxu0 0.0
        %773 = vmatpush1.msra.mxu0 %v650
        %774 = vmatprep.subr.mxu0 0.0
        %775 = vmatpush1.msra.mxu0 %v649
        %776 = vmatprep.subr.mxu0 0.0
        %777 = vmatpush1.msra.mxu0 %v648
        %778 = vmatprep.subr.mxu0 0.0
        %779 = vmatpush1.msra.mxu0 %v647
        %780 = vmatprep.subr.mxu0 0.0
        %781 = vmatpush1.msra.mxu0 %v646
        %782 = vmatprep.subr.mxu0 0.0
        %783 = vmatpush1.msra.mxu0 %v645
        %784 = vmatprep.subr.mxu0 0.0
        %785 = vmatpush1.msra.mxu0 %v644
        %786 = vmatprep.subr.mxu0 0.0
        %787 = vmatpush1.msra.mxu0 %v643
        %788 = vmatprep.subr.mxu0 0.0
        %789 = vmatpush1.msra.mxu0 %v642
        %790 = vmatprep.subr.mxu0 0.0
        %791 = vmatpush2.msra.mxu0 0.0
        %792 = vmatprep.subr.mxu0 0.0
        %793 = vmatpush2.msra.mxu0 0.0
        %794 = vmatprep.subr.mxu0 0.0
        %795 = vmatpush2.msra.mxu0 0.0
        %796 = vmatprep.subr.mxu0 0.0
        %797 = vmatpush2.msra.mxu0 0.0
        %798 = vmatprep.subr.mxu0 0.0
        %799 = vmatpush2.msra.mxu0 0.0
        %800 = vmatprep.subr.mxu0 0.0
        %801 = vmatpush2.msra.mxu0 0.0
        %802 = vmatprep.subr.mxu0 0.0
        %803 = vmatpush2.msra.mxu0 0.0
        %804 = vmatprep.subr.mxu0 0.0
        %805 = vmatpush2.msra.mxu0 0.0
        %806 = vmatprep.subr.mxu0 0.0
        %807 = vmatpush2.msra.mxu0 0.0
        %808 = vmatprep.subr.mxu0 0.0
        %809 = vmatpush2.msra.mxu0 0.0
        %810 = vmatprep.subr.mxu0 0.0
        %811 = vmatpush2.msra.mxu0 0.0
        %812 = vmatprep.subr.mxu0 0.0
        %813 = vmatpush2.msra.mxu0 0.0
        %814 = vmatprep.subr.mxu0 0.0
        %815 = vmatpush2.msra.mxu0 0.0
        %816 = vmatprep.subr.mxu0 0.0
        %817 = vmatpush2.msra.mxu0 0.0
        %818 = vmatprep.subr.mxu0 0.0
        %819 = vmatpush2.msra.mxu0 0.0
        %820 = vmatprep.subr.mxu0 0.0
        %821 = vmatpush2.msra.mxu0 0.0
        %822 = vmatprep.mubr.f32.mxu0 0.0
        %823 = vmatmul.mubr.f32.gmra.mxu0 %v639
        %v824 = vpop.f32.mrf.mxu0
        %v825 = vadd.f32 %v745, %v824
        %v826 = vpop.f32.mrf.mxu0
        %827 = vmatprep.mubr.f32.mxu0 0.0
        %828 = vmatmul.mubr.f32.gmra.mxu0 %v640
        %v829 = vpop.f32.mrf.mxu0
        %v830 = vadd.f32 %v750, %v829
        %v831 = vpop.f32.mrf.mxu0
        %832 = vmatprep.mubr.f32.mxu0 0.0
        %833 = vmatmul.mubr.f32.gmra.mxu0 %v641
        %v834 = vpop.f32.mrf.mxu0
        %v835 = vadd.f32 %v755, %v834
        %v836 = vpop.f32.mrf.mxu0
        %837 = vdwg.mxu0
        %v838 = vld [vmem:[#allocation2 + $0x9] sm:$0xff]
        %v839 = vld [vmem:[#allocation2 + $0x11] sm:$0xff]
        %v840 = vld [vmem:[#allocation2 + $0x19] sm:$0x3]
        %s841 = scalar_lea.vmem [#allocation6], 256
        %v842 = vld [vmem:[%s841] sm:$0xff]
        %v843 = vld [vmem:[%s841 + $0x8] sm:$0xff]
        %v844 = vld [vmem:[%s841 + $0x10] sm:$0xff]
        %v845 = vld [vmem:[%s841 + $0x18] sm:$0xff]
        %v846 = vld [vmem:[%s841 + $0x20] sm:$0xff]
        %v847 = vld [vmem:[%s841 + $0x28] sm:$0xff]
        %v848 = vld [vmem:[%s841 + $0x30] sm:$0xff]
        %v849 = vld [vmem:[%s841 + $0x38] sm:$0xff]
        %v850 = vld [vmem:[%s841 + $0x40] sm:$0xff]
        %v851 = vld [vmem:[%s841 + $0x48] sm:$0xff]
        %v852 = vld [vmem:[%s841 + $0x50] sm:$0xff]
        %v853 = vld [vmem:[%s841 + $0x58] sm:$0xff]
        %v854 = vld [vmem:[%s841 + $0x60] sm:$0xff]
        %v855 = vld [vmem:[%s841 + $0x68] sm:$0xff]
        %v856 = vld [vmem:[%s841 + $0x70] sm:$0xff]
        %v857 = vld [vmem:[%s841 + $0x78] sm:$0xff]
        %858 = vmatprep.subr.mxu0 0.0
        %859 = vmatpush1.msra.mxu0 %v857
        %860 = vmatprep.subr.mxu0 0.0
        %861 = vmatpush1.msra.mxu0 %v856
        %862 = vmatprep.subr.mxu0 0.0
        %863 = vmatpush1.msra.mxu0 %v855
        %864 = vmatprep.subr.mxu0 0.0
        %865 = vmatpush1.msra.mxu0 %v854
        %866 = vmatprep.subr.mxu0 0.0
        %867 = vmatpush1.msra.mxu0 %v853
        %868 = vmatprep.subr.mxu0 0.0
        %869 = vmatpush1.msra.mxu0 %v852
        %870 = vmatprep.subr.mxu0 0.0
        %871 = vmatpush1.msra.mxu0 %v851
        %872 = vmatprep.subr.mxu0 0.0
        %873 = vmatpush1.msra.mxu0 %v850
        %874 = vmatprep.subr.mxu0 0.0
        %875 = vmatpush1.msra.mxu0 %v849
        %876 = vmatprep.subr.mxu0 0.0
        %877 = vmatpush1.msra.mxu0 %v848
        %878 = vmatprep.subr.mxu0 0.0
        %879 = vmatpush1.msra.mxu0 %v847
        %880 = vmatprep.subr.mxu0 0.0
        %881 = vmatpush1.msra.mxu0 %v846
        %882 = vmatprep.subr.mxu0 0.0
        %883 = vmatpush1.msra.mxu0 %v845
        %884 = vmatprep.subr.mxu0 0.0
        %885 = vmatpush1.msra.mxu0 %v844
        %886 = vmatprep.subr.mxu0 0.0
        %887 = vmatpush1.msra.mxu0 %v843
        %888 = vmatprep.subr.mxu0 0.0
        %889 = vmatpush1.msra.mxu0 %v842
        %890 = vmatprep.subr.mxu0 0.0
        %891 = vmatpush2.msra.mxu0 0.0
        %892 = vmatprep.subr.mxu0 0.0
        %893 = vmatpush2.msra.mxu0 0.0
        %894 = vmatprep.subr.mxu0 0.0
        %895 = vmatpush2.msra.mxu0 0.0
        %896 = vmatprep.subr.mxu0 0.0
        %897 = vmatpush2.msra.mxu0 0.0
        %898 = vmatprep.subr.mxu0 0.0
        %899 = vmatpush2.msra.mxu0 0.0
        %900 = vmatprep.subr.mxu0 0.0
        %901 = vmatpush2.msra.mxu0 0.0
        %902 = vmatprep.subr.mxu0 0.0
        %903 = vmatpush2.msra.mxu0 0.0
        %904 = vmatprep.subr.mxu0 0.0
        %905 = vmatpush2.msra.mxu0 0.0
        %906 = vmatprep.subr.mxu0 0.0
        %907 = vmatpush2.msra.mxu0 0.0
        %908 = vmatprep.subr.mxu0 0.0
        %909 = vmatpush2.msra.mxu0 0.0
        %910 = vmatprep.subr.mxu0 0.0
        %911 = vmatpush2.msra.mxu0 0.0
        %912 = vmatprep.subr.mxu0 0.0
        %913 = vmatpush2.msra.mxu0 0.0
        %914 = vmatprep.subr.mxu0 0.0
        %915 = vmatpush2.msra.mxu0 0.0
        %916 = vmatprep.subr.mxu0 0.0
        %917 = vmatpush2.msra.mxu0 0.0
        %918 = vmatprep.subr.mxu0 0.0
        %919 = vmatpush2.msra.mxu0 0.0
        %920 = vmatprep.subr.mxu0 0.0
        %921 = vmatpush2.msra.mxu0 0.0
        %922 = vmatprep.mubr.f32.mxu0 0.0
        %923 = vmatmul.mubr.f32.gmra.mxu0 %v838
        %v924 = vpop.f32.mrf.mxu0
        %v925 = vadd.f32 0.0, %v924
        %v926 = vpop.f32.mrf.mxu0
        %927 = vmatprep.mubr.f32.mxu0 0.0
        %928 = vmatmul.mubr.f32.gmra.mxu0 %v839
        %v929 = vpop.f32.mrf.mxu0
        %v930 = vadd.f32 0.0, %v929
        %v931 = vpop.f32.mrf.mxu0
        %932 = vmatprep.mubr.f32.mxu0 0.0
        %933 = vmatmul.mubr.f32.gmra.mxu0 %v840
        %v934 = vpop.f32.mrf.mxu0
        %v935 = vadd.f32 0.0, %v934
        %v936 = vpop.f32.mrf.mxu0
        %937 = vdwg.mxu0
        %v938 = vadd.f32 %v825, %v925
        %v939 = vadd.f32 %v830, %v930
        %v940 = vadd.f32 %v835, %v935
        %v941 = vld [vmem:[%s5] sm:$0x1]
        %v943 = vlaneseq
        %v944 = vshrl.u32 %v943, 7
        %v945 = vsub.s32 0, %v944
        %v946 = vrot.slane %v941, %v945
        %v948 = vmul.f32 %v938, %v946
        %v949 = vmul.f32 %v939, %v946
        %v950 = vmul.f32 %v940, %v946
        %v951 = vld [vmem:[%s6] sm:$0x1]
        %v953 = vlaneseq
        %v954 = vshrl.u32 %v953, 7
        %v955 = vsub.s32 0, %v954
        %v956 = vrot.slane %v951, %v955
        %v958 = vadd.f32 %v948, %v956
        %v959 = vadd.f32 %v949, %v956
        %v960 = vadd.f32 %v950, %v956
        %v961 = vld [vmem:[%s306 + $0x8] sm:$0xff]
        %v962 = vld [vmem:[%s306 + $0x10] sm:$0xff]
        %v963 = vld [vmem:[%s306 + $0x18] sm:$0x3]
        %v964 = vadd.f32 %v958, %v961
        %v965 = vadd.f32 %v959, %v962
        %v966 = vadd.f32 %v960, %v963
        %v967 = vmax.f32 %v964, 0.0
        %v968 = vmax.f32 %v965, 0.0
        %v969 = vmax.f32 %v966, 0.0
        %970 = vst [vmem:[#allocation2 + $0x8] sm:$0xff] %v967
        %971 = vst [vmem:[#allocation2 + $0x10] sm:$0xff] %v968
        %972 = vst [vmem:[#allocation2 + $0x18] sm:$0x3] %v969
        %v973 = vld [vmem:[#allocation2 + $0x9] sm:$0xff]
        %v974 = vld [vmem:[#allocation2 + $0x11] sm:$0xff]
        %v975 = vld [vmem:[#allocation2 + $0x19] sm:$0x3]
        %v976 = vmax.f32 %v967, %v973
        %v977 = vmax.f32 %v968, %v974
        %v978 = vmax.f32 %v969, %v975
        %979 = vst [vmem:[#allocation2 + $0x8] sm:$0xff] %v976
        %980 = vst [vmem:[#allocation2 + $0x10] sm:$0xff] %v977
        %981 = vst [vmem:[#allocation2 + $0x18] sm:$0x3] %v978
        %s982 = scalar_lea.vmem [#allocation2], 9
        %v983 = vld [vmem:[%s982] ss:$2 sm:$0xff]
        %984 = vst [vmem:[%s301] sm:$0xff] %v983
        %s985 = sand.u32 %s183, 1
        %s986 = scalar_lea.sflag [#allocation5], %s985
        %s987 = sand.u32 %s183, 1
        %s988 = smul.addr %s987, 8
        %s989 = scalar_lea.vmem [#allocation8], %s988
        // Predicated region
        $region57: #{tpu_custom_call.1} parent=47 // pred_check
          %p990 = pneg %p193
        $region58: #{tpu_custom_call.1} parent=47 // pred_check_branch
          %992 = sbr.rel (%p990) target = $region60
        $region59: #{tpu_custom_call.1} parent=47 // pred_region
          %s994 = ssub.s32 128, 128
          %995 = vsyncadd %s986, %s994
          %s996 = smul.addr %s23, 128
          %s997 = scalar_lea.hbm %s7, %s996
          %s999 = sshll.u32 %s989, 4
          %s1000 = int_to_ptr.vmem [resolvable:$true] %s999
          %1002 = dma.vmem_to_hbm [thread:$0]  %s1000, 128, %s997, %s986
        $region60: #{tpu_custom_call.1} parent=47 // pred_fallthru
          _
      $region48: #{tpu_custom_call.1} parent=5 // pred_fallthru
        _
      %p1003 = scmp.le.s32.totalorder 2, %s18
      // Predicated region
      $region61: #{tpu_custom_call.1} parent=5 // pred_check
        %p1004 = pneg %p1003
      $region62: #{tpu_custom_call.1} parent=5 // pred_check_branch
        %1006 = sbr.rel (%p1004) target = $region64
      $region63: #{tpu_custom_call.1} parent=5 // pred_region
        %s1007 = ssub.s32 %s18, 2
        // Predicated region
        $region65: #{tpu_custom_call.1} parent=63 // pred_check
          %p1008 = pneg %p199
        $region66: #{tpu_custom_call.1} parent=63 // pred_check_branch
          %1010 = sbr.rel (%p1008) target = $region68
        $region67: #{tpu_custom_call.1} parent=63 // pred_region
          %s1011 = sand.u32 %s184, 1
          %s1012 = scalar_lea.sflag [#allocation5], %s1011
          %s1013 = sand.u32 %s184, 1
          %s1014 = smul.addr %s1013, 8
          %s1015 = scalar_lea.vmem [#allocation8], %s1014
          %1016 = dma.done %s1012, 128
        $region68: #{tpu_custom_call.1} parent=63 // pred_fallthru
          _
      $region64: #{tpu_custom_call.1} parent=5 // pred_fallthru
        _
    $region6: #{tpu_custom_call.1} parent=1 // loop_footer
      %s22 = sadd.s32 1, %s18
    $region7: #{tpu_custom_call.1} parent=1 // loop_footer_branch
      %17 = sbr.rel target = $region3
    $region8: #{tpu_custom_call.1} parent=1 // loop_exit
      _
    %1017 = vsyncpa [#allocation4], 1
    %s1018 = scalar_lea.sflag [#allocation4], 1
    %1019 = vsyncpa %s1018, 1
    %1020 = vsyncpa [#allocation7], 1
    %1021 = vsyncpa [#allocation5], 1
    %s1022 = scalar_lea.sflag [#allocation5], 1
    %1023 = vsyncpa %s1022, 1

</llo_original>
